<compile_context>
chip_gen: v7x
topology: tpu7x:2x2x1
jax: 0.10.0
libtpu: 0.0.40
codegen_flags: <defaults>
</compile_context>

<pallas_src>
import functools

import jax
import jax.numpy as jnp
from jax.experimental import pallas as pl
from jax.experimental.pallas import tpu as pltpu


COEF = 0.97


def _round_up(x: int, m: int) -> int:
    return (x + m - 1) // m * m


def _pre_emphasis_kernel(x_ref, o_ref, carry_ref, *, coef, block_t, t_tiled):
    j = pl.program_id(1)                       # time-block index ("arbitrary")
    x = x_ref[...]                             # (block_b, block_t) in VMEM
    # x[t-1] for every lane; lane 0 wraps around and is fixed below.
    # XLU rotate — off the VALU / load-store critical path.
    prev = pltpu.roll(x, shift=1, axis=1)
    o_ref[...] = x - coef * prev

    if t_tiled:
        # First time block: reflect padding -> previous sample of t=0 is x[:,1].
        @pl.when(j == 0)
        def _():
            o_ref[:, 0:1] = x[:, 0:1] - coef * x[:, 1:2]

        # Later time blocks: previous sample is the last lane of the previous
        # block, carried across steps in VMEM (no extra HBM traffic).
        @pl.when(j > 0)
        def _():
            o_ref[:, 0:1] = x[:, 0:1] - coef * carry_ref[:, 127:128]

        # Stash this block's trailing 128-lane slab for the next time step.
        # Written after the read above; never consumed at the last time block
        # (the next grid step restarts at j == 0 for a new batch block).
        carry_ref[...] = x[:, block_t - 128:block_t]
    else:
        # Single time block: only the reflect fix is needed.
        o_ref[:, 0:1] = x[:, 0:1] - coef * x[:, 1:2]


def _vmem_budget():
    """Per-generation (target_tile_bytes, vmem_limit_bytes) from the local chip."""
    try:
        cap = int(pltpu.get_tpu_info().vmem_capacity_bytes)
    except Exception:
        cap = 64 << 20                         # conservative: v7x per-core VMEM
    vmem_limit = min(cap * 3 // 4, 100 << 20)  # headroom below physical VMEM
    # Double-buffered in + out ~= 4x tile (+ tiny carry scratch); keep that at
    # roughly 2/3 of the scoped limit.  v7x -> ~8 MiB tiles, v5e/v6e -> 16 MiB.
    target_tile = min(16 << 20, vmem_limit // 6)
    return target_tile, vmem_limit


def _pick_tiles(B: int, T: int, target_tile_bytes: int):
    Bpad = _round_up(B, 8)
    Tpad = _round_up(T, 128)
    # Rows per block: split the padded batch into ~4 blocks (>= 8 rows each)
    # when it is large enough so v7x's two TensorCores get a balanced share of
    # the "parallel" axis.  For long audio the total grid-step count is fixed
    # by the byte budget, so splitting along B instead of T is essentially
    # free on single-core chips (v5e / v6e).
    if Bpad >= 16:
        block_b = max(8, 8 * (Bpad // 32))
    else:
        block_b = Bpad
    block_b = min(block_b, max(8, (target_tile_bytes // (4 * 128)) // 8 * 8))
    # Lanes per block: fill the byte budget, multiple of 128 (lane-dense,
    # unmasked stores); take the whole time axis when it fits.
    block_t = max(128, (target_tile_bytes // (4 * block_b)) // 128 * 128)
    if block_t >= Tpad:
        block_t = T
    return block_b, block_t


def pre_emphasis(x: jax.Array, *, coef: float = COEF,
                 block_b: int | None = None,
                 block_t: int | None = None) -> jax.Array:
    """x: (B, T) float32 waveform batch -> pre-emphasized (B, T)."""
    B, T = x.shape
    if T < 2:
        raise ValueError("PreEmphasis needs T >= 2 (reflect padding).")

    target_tile_bytes, vmem_limit_bytes = _vmem_budget()
    auto_b, auto_t = _pick_tiles(B, T, target_tile_bytes)
    block_b = auto_b if block_b is None else block_b
    block_t = auto_t if block_t is None else block_t

    # Validate / normalize overrides against the (8, 128) layout rules.
    if block_t >= T:
        block_t = T
    elif block_t % 128 != 0:
        raise ValueError("block_t must be a multiple of 128 when tiling T.")
    if block_b != B and block_b % 8 != 0:
        raise ValueError("block_b must be a multiple of 8 (or equal to B).")

    grid_b = pl.cdiv(B, block_b)
    grid_t = pl.cdiv(T, block_t)
    t_tiled = grid_t > 1

    kernel = functools.partial(_pre_emphasis_kernel, coef=coef,
                               block_t=block_t, t_tiled=t_tiled)
    return pl.pallas_call(
        kernel,
        out_shape=jax.ShapeDtypeStruct((B, T), x.dtype),
        grid_spec=pltpu.PrefetchScalarGridSpec(
            num_scalar_prefetch=0,
            grid=(grid_b, grid_t),
            in_specs=[pl.BlockSpec((block_b, block_t), lambda i, j: (i, j))],
            out_specs=pl.BlockSpec((block_b, block_t), lambda i, j: (i, j)),
            # Carry of the previous block's trailing lanes (used only when T
            # is tiled; negligible VMEM either way).
            scratch_shapes=[pltpu.VMEM((block_b, 128), x.dtype)],
        ),
        compiler_params=pltpu.CompilerParams(
            dimension_semantics=("parallel", "arbitrary"),
            vmem_limit_bytes=vmem_limit_bytes,
        ),
    )(x)


def _reference(x: jax.Array, coef: float = COEF) -> jax.Array:
    # Pure-JAX reference reproducing F.pad(..., 'reflect') + conv1d([-c, 1]).
    padded = jnp.concatenate([x[:, 1:2], x], axis=1)          # (B, T+1)
    return -coef * padded[:, :-1] + 1.0 * padded[:, 1:]       # (B, T)


if __name__ == "__main__":
    key = jax.random.PRNGKey(0)

    # Case 1: auto tiling; B=10 is deliberately not a multiple of 8 so the
    # ragged / partial-last-batch-block path is exercised.
    B1, T1 = 10, 256
    x1 = jax.random.normal(key, (B1, T1), dtype=jnp.float32)
    y1 = jax.block_until_ready(pre_emphasis(x1))
    assert y1.shape == (B1, T1) and y1.dtype == jnp.float32
    assert jnp.allclose(y1, _reference(x1), atol=1e-6, rtol=1e-6), \
        "mismatch vs reference (auto tiling)"

    # Case 2: force T tiling (block_t=128 over T=500) to exercise the VMEM
    # boundary-carry path, the partial last time block, and B < 8 padding.
    B2, T2 = 6, 500
    x2 = jax.random.normal(jax.random.PRNGKey(1), (B2, T2), dtype=jnp.float32)
    y2 = jax.block_until_ready(pre_emphasis(x2, block_t=128))
    assert y2.shape == (B2, T2) and y2.dtype == jnp.float32
    assert jnp.allclose(y2, _reference(x2), atol=1e-6, rtol=1e-6), \
        "mismatch vs reference (T-tiled carry path)"

    print("KERNEL_OK")
</pallas_src>

<mosaic_0001>
module attributes {stable_mosaic.version = 11 : i64} {
  func.func @_pre_emphasis_kernel(%arg0: i32, %arg1: i32, %arg2: memref<8x256xf32, #tpu.memory_space<vmem>>, %arg3: memref<8x256xf32, #tpu.memory_space<vmem>>, %arg4: memref<8x128xf32, #tpu.memory_space<vmem>>) attributes {dimension_semantics = [#tpu.dimension_semantics<parallel>, #tpu.dimension_semantics<arbitrary>], iteration_bounds = array<i64: 2, 1>, scalar_prefetch = 0 : i64, scratch_operands = 1 : i64, tpu.core_type = #tpu.core_type<tc>, window_params = [{transform_indices = @transform_0, window_bounds = array<i64: 8, 256>}, {transform_indices = @transform_1, window_bounds = array<i64: 8, 256>}]} {
    %c0 = arith.constant 0 : index
    %c0_0 = arith.constant 0 : index
    %0 = vector.load %arg2[%c0, %c0_0] : memref<8x256xf32, #tpu.memory_space<vmem>>, vector<8x256xf32>
    %c1_i32 = arith.constant 1 : i32
    %1 = tpu.dynamic_rotate %0 by %c1_i32 dim 1 : vector<8x256xf32>, i32 -> vector<8x256xf32>
    %cst = arith.constant 9.700000e-01 : f32
    %2 = vector.broadcast %cst : f32 to vector<8x256xf32>
    %3 = arith.mulf %2, %1 : vector<8x256xf32>
    %4 = arith.subf %0, %3 : vector<8x256xf32>
    %c0_1 = arith.constant 0 : index
    %c0_2 = arith.constant 0 : index
    %5 = vector.load %arg3[%c0_1, %c0_2] : memref<8x256xf32, #tpu.memory_space<vmem>>, vector<8x256xf32>
    tpu.vector_store %arg3[%c0_1, %c0_2], %4 {strides = array<i32>} : memref<8x256xf32, #tpu.memory_space<vmem>>, vector<8x256xf32>,
    %6 = vector.extract_strided_slice %0 {offsets = [0, 0], sizes = [8, 1], strides = [1, 1]} : vector<8x256xf32> to vector<8x1xf32>
    %7 = vector.extract_strided_slice %0 {offsets = [0, 1], sizes = [8, 1], strides = [1, 1]} : vector<8x256xf32> to vector<8x1xf32>
    %cst_3 = arith.constant 9.700000e-01 : f32
    %8 = vector.broadcast %cst_3 : f32 to vector<8x1xf32>
    %9 = arith.mulf %8, %7 : vector<8x1xf32>
    %10 = arith.subf %6, %9 : vector<8x1xf32>
    %c0_4 = arith.constant 0 : index
    %c0_5 = arith.constant 0 : index
    %11 = vector.load %arg3[%c0_4, %c0_5] : memref<8x256xf32, #tpu.memory_space<vmem>>, vector<8x1xf32>
    tpu.vector_store %arg3[%c0_4, %c0_5], %10 {strides = array<i32>} : memref<8x256xf32, #tpu.memory_space<vmem>>, vector<8x1xf32>,
    return
  }
  func.func @transform_0(%arg0: i32, %arg1: i32) -> (i32, i32) {
    %c0_i32 = arith.constant 0 : i32
    return %arg0, %arg1 : i32, i32
  }
  func.func @transform_1(%arg0: i32, %arg1: i32) -> (i32, i32) {
    %c0_i32 = arith.constant 0 : i32
    return %arg0, %arg1 : i32, i32
  }
}

</mosaic_0001>

<llo_original>
// kernel: tpu_custom_call.1
$region0: #{tpu_custom_call.1}
  #allocation0 [shape = 'u32[]', space=smem, size = 0x4, offset = 0x4, fixed_abs, tag = 'smem constant byte address 0x4 - core index']
  #allocation1 [shape = 'u32[144,128]{1,0:T(1,128)}', space=vmem, size = 0x12000, scoped, tag = 'internal scratch']
  #allocation2 [shape = 'f32[8,128]{1,0:T(8,128)}', space=vmem, size = 0x1000, scoped, tag = 'scratch operand']
  %s0 = inlined_call_operand.hbm [shape: f32[10,256], index: 0, kind: input, shape index: {}]
  %s1 = inlined_call_operand.hbm [shape: f32[10,256], index: 1, kind: output, shape index: {}]
  %s2 = sld [smem:[#allocation0]]
  $region41: #{tpu_custom_call.1} parent=0
    _
  %s4 = ssub.s32 1, %s2
  %s5 = scalar_select 0, %s4, %s2
  $region1: #{tpu_custom_call.1} parent=0
    #allocation3 [shape = 'u8[16384]{0}', space=vmem, size = 0x4000, scoped, tag = 'input window, operand 0']
    #allocation4 [shape = 's32[2]{0}', space=sflag, size = 0x8, scoped, tag = 'scoped memory for tpu_custom_call.1']
    #allocation5 [shape = 's32[2]{0}', space=sflag, size = 0x8, scoped, tag = 'scoped memory for tpu_custom_call.1']
    #allocation6 [shape = 'u8[16384]{0}', space=vmem, size = 0x4000, scoped, tag = 'output window, operand 0']
    %6 = vsyncpa [#allocation4], 0
    %s7 = scalar_lea.sflag [#allocation4], 1
    %8 = vsyncpa %s7, 0
    %9 = vsyncpa [#allocation5], 0
    %s10 = scalar_lea.sflag [#allocation5], 1
    %11 = vsyncpa %s10, 0
    loop: start=0, step=1, limit=4
    $region2: #{tpu_custom_call.1} parent=1 // loop_pre_header
      _
    $region3: #{tpu_custom_call.1} parent=1 // loop_header
      %s13 = sphi 0, %s17
      %p14 = scmp.ge.s32.totalorder %s13, 4
      %s20 = sphi 0, %s32
      %s21 = sphi 0, %s28
      %s22 = sphi 0, %s20
      %s23 = sphi 0, %s21
      %s24 = sphi 0, %s22
      %s25 = sphi 0, %s23
      %s37 = sphi 0, %s39
      %s40 = sphi 0, %s37
      %s41 = sphi 0, %s40
      %s57 = sphi 0, %s41
      %s65 = sphi 0, %s67
      %s68 = sphi 0, %s65
      %s69 = sphi 0, %s68
      %s85 = sphi 0, %s69
    $region4: #{tpu_custom_call.1} parent=1 // loop_header_branch
      %16 = sbr.rel (%p14) target = $region8
    $region5: #{tpu_custom_call.1} parent=1 // loop_body
      %s18 = ssub.s32 %s13, 1
      %s19 = ssub.s32 %s13, 2
      %s26 = sadd.s32 1, %s21
      %p27 = scmp.ge.s32.totalorder %s26, 1
      %s28 = scalar_select %p27, 0, %s26
      %s29 = sadd.s32 1, %s20
      %s30 = scalar_select %p27, %s29, %s20
      %p31 = scmp.ge.s32.totalorder %s30, 2
      %s32 = scalar_select %p31, 0, %s30
      %s33 = ssub.s32 %s20, %s32
      %s34 = ssub.s32 %s21, %s28
      %s35 = sor.u32 %s33, %s34
      %p36 = scmp.eq.s32.totalorder %s35, 0
      %s38 = sadd.s32 %s37, 1
      %s39 = scalar_select %p36, %s37, %s38
      %p42 = pneg %p36
      %p43 = scmp.eq.s32.totalorder %s13, 1
      %p44 = por %p42, %p43
      %p45 = scmp.ne.s32.totalorder %s37, %s40
      %p46 = scmp.eq.s32.totalorder %s13, 0
      %p47 = por %p45, %p46
      %p48 = scmp.ne.s32.totalorder %s37, %s40
      %p49 = scmp.eq.s32.totalorder %s18, 1
      %p50 = por %p48, %p49
      %p51 = scmp.ne.s32.totalorder %s40, %s41
      %p52 = scmp.eq.s32.totalorder %s18, 0
      %p53 = por %p51, %p52
      %p54 = scmp.ne.s32.totalorder %s40, %s41
      %p55 = scmp.eq.s32.totalorder %s19, 1
      %p56 = por %p54, %p55
      %p58 = scmp.ne.s32.totalorder %s41, %s57
      %p59 = scmp.eq.s32.totalorder %s19, 0
      %p60 = por %p58, %p59
      %s61 = ssub.s32 %s20, %s32
      %s62 = ssub.s32 %s21, %s28
      %s63 = sor.u32 %s61, %s62
      %p64 = scmp.eq.s32.totalorder %s63, 0
      %s66 = sadd.s32 %s65, 1
      %s67 = scalar_select %p64, %s65, %s66
      %p70 = pneg %p64
      %p71 = scmp.eq.s32.totalorder %s13, 1
      %p72 = por %p70, %p71
      %p73 = scmp.ne.s32.totalorder %s65, %s68
      %p74 = scmp.eq.s32.totalorder %s13, 0
      %p75 = por %p73, %p74
      %p76 = scmp.ne.s32.totalorder %s65, %s68
      %p77 = scmp.eq.s32.totalorder %s18, 1
      %p78 = por %p76, %p77
      %p79 = scmp.ne.s32.totalorder %s68, %s69
      %p80 = scmp.eq.s32.totalorder %s18, 0
      %p81 = por %p79, %p80
      %p82 = scmp.ne.s32.totalorder %s68, %s69
      %p83 = scmp.eq.s32.totalorder %s19, 1
      %p84 = por %p82, %p83
      %p86 = scmp.ne.s32.totalorder %s69, %s85
      %p87 = scmp.eq.s32.totalorder %s19, 0
      %p88 = por %p86, %p87
      %p89 = scmp.le.s32.totalorder 1, %s13
      %p90 = scmp.lt.s32.totalorder %s13, 3
      %p91 = pnand %p89, %p90
      %p92 = pneg %p91
      // Predicated region
      $region9: #{tpu_custom_call.1} parent=5 // pred_check
        _
      $region10: #{tpu_custom_call.1} parent=5 // pred_check_branch
        %94 = sbr.rel (%p91) target = $region12
      $region11: #{tpu_custom_call.1} parent=5 // pred_region
        %s95 = ssub.s32 %s13, 1
      $region12: #{tpu_custom_call.1} parent=5 // pred_fallthru
        _
      %p96 = scmp.lt.s32.totalorder %s13, 2
      // Predicated region
      $region13: #{tpu_custom_call.1} parent=5 // pred_check
        %p97 = pneg %p96
      $region14: #{tpu_custom_call.1} parent=5 // pred_check_branch
        %99 = sbr.rel (%p97) target = $region16
      $region15: #{tpu_custom_call.1} parent=5 // pred_region
        // Predicated region
        $region17: #{tpu_custom_call.1} parent=15 // pred_check
          %p100 = pneg %p47
        $region18: #{tpu_custom_call.1} parent=15 // pred_check_branch
          %102 = sbr.rel (%p100) target = $region20
        $region19: #{tpu_custom_call.1} parent=15 // pred_region
          %s103 = sand.u32 %s37, 1
          %s104 = scalar_lea.sflag [#allocation4], %s103
          %s105 = sand.u32 %s37, 1
          %s106 = smul.addr %s105, 16
          %s107 = scalar_lea.vmem [#allocation3], %s106
          %s108 = smul.u32 2, %s21
          %s110 = ssub.s32 256, 256
          %111 = vsyncadd %s104, %s110
          %s112 = smul.addr %s20, 2
          %s113 = sadd.s32 %s108, %s112
          %s114 = smul.addr %s113, 128
          %s115 = scalar_lea.hbm %s0, %s114
          %s117 = sshll.u32 %s107, 4
          %s118 = int_to_ptr.vmem [resolvable:$true] %s117
          %120 = dma.hbm_to_vmem [thread:$0]  %s115, 256, %s118, %s104
        $region20: #{tpu_custom_call.1} parent=15 // pred_fallthru
          _
      $region16: #{tpu_custom_call.1} parent=5 // pred_fallthru
        _
      %p121 = scmp.le.s32.totalorder 1, %s13
      %p122 = scmp.lt.s32.totalorder %s13, 3
      %p123 = pnand %p121, %p122
      %p124 = pneg %p123
      // Predicated region
      $region21: #{tpu_custom_call.1} parent=5 // pred_check
        _
      $region22: #{tpu_custom_call.1} parent=5 // pred_check_branch
        %126 = sbr.rel (%p123) target = $region24
      $region23: #{tpu_custom_call.1} parent=5 // pred_region
        %s127 = ssub.s32 %s13, 1
        %s128 = sand.u32 %s40, 1
        %s129 = scalar_lea.sflag [#allocation4], %s128
        %s130 = sand.u32 %s40, 1
        %s131 = smul.addr %s130, 16
        %s132 = scalar_lea.vmem [#allocation3], %s131
        // Predicated region
        $region25: #{tpu_custom_call.1} parent=23 // pred_check
          %p133 = pneg %p53
        $region26: #{tpu_custom_call.1} parent=23 // pred_check_branch
          %135 = sbr.rel (%p133) target = $region28
        $region27: #{tpu_custom_call.1} parent=23 // pred_region
          %136 = dma.done %s129, 256
        $region28: #{tpu_custom_call.1} parent=23 // pred_fallthru
          _
        %s137 = sand.u32 %s40, 1
        %s138 = scalar_lea.sflag [#allocation4], %s137
        %s139 = sand.u32 %s40, 1
        %s140 = smul.addr %s139, 16
        %s141 = scalar_lea.vmem [#allocation3], %s140
        %p142 = pneg %p53
        %p143 = pneg %p50
        %p144 = pneg %p81
        %p145 = pneg %p78
        %s146 = sand.u32 %s68, 1
        %s147 = scalar_lea.sflag [#allocation5], %s146
        %s148 = sand.u32 %s68, 1
        %s149 = smul.addr %s148, 16
        %s150 = scalar_lea.vmem [#allocation6], %s149
        %s151 = smul.u32 2, %s23
        %s152 = smul.u32 2, %s23
        %v153 = vld [vmem:[%s132] sm:$0xff]
        %v154 = vld [vmem:[%s132 + $0x8] sm:$0xff]
        %155 = vrot.lane.b32.xlu0 %v153, 1
        %v156 = vpop.permute.xlu0 %155
        %157 = vrot.lane.b32.xlu0 %v154, 1
        %v158 = vpop.permute.xlu0 %157
        %v159 = vlaneseq
        %v160 = vand.u32 %v159, 127
        %vm161 = vcmp.lt.s32.totalorder %v160, 1
        %v162 = vsel %vm161, %v156, %v158
        %v163 = vsel %vm161, %v158, %v156
        %v164 = vmul.f32 %v163, 0.97
        %v165 = vmul.f32 %v162, 0.97
        %v166 = vsub.f32 %v153, %v164
        %v167 = vsub.f32 %v154, %v165
        %168 = vst [vmem:[%s150] sm:$0xff] %v166
        %169 = vst [vmem:[%s150 + $0x8] sm:$0xff] %v167
        %v170 = vmul.f32 %v153, 0.97
        %172 = vrot.lane.b32.xlu0 %v170, 127
        %v173 = vpop.permute.xlu0 %172
        %v175 = vsub.f32 %v153, %v173
        %vm176 = vcmask 7168
        %177 = vst.msk [vmem:[%s150] sm:$0xff] %vm176, %v175
        %s178 = sand.u32 %s68, 1
        %s179 = scalar_lea.sflag [#allocation5], %s178
        %s180 = sand.u32 %s68, 1
        %s181 = smul.addr %s180, 16
        %s182 = scalar_lea.vmem [#allocation6], %s181
        // Predicated region
        $region29: #{tpu_custom_call.1} parent=23 // pred_check
          %p183 = pneg %p78
        $region30: #{tpu_custom_call.1} parent=23 // pred_check_branch
          %185 = sbr.rel (%p183) target = $region32
        $region31: #{tpu_custom_call.1} parent=23 // pred_region
          %s186 = smul.u32 2, %s23
          %s188 = ssub.s32 256, 256
          %189 = vsyncadd %s179, %s188
          %s190 = smul.addr %s22, 2
          %s191 = sadd.s32 %s186, %s190
          %s192 = smul.addr %s191, 128
          %s193 = scalar_lea.hbm %s1, %s192
          %s195 = sshll.u32 %s182, 4
          %s196 = int_to_ptr.vmem [resolvable:$true] %s195
          %198 = dma.vmem_to_hbm [thread:$0]  %s196, 256, %s193, %s179
        $region32: #{tpu_custom_call.1} parent=23 // pred_fallthru
          _
      $region24: #{tpu_custom_call.1} parent=5 // pred_fallthru
        _
      %p199 = scmp.le.s32.totalorder 2, %s13
      // Predicated region
      $region33: #{tpu_custom_call.1} parent=5 // pred_check
        %p200 = pneg %p199
      $region34: #{tpu_custom_call.1} parent=5 // pred_check_branch
        %202 = sbr.rel (%p200) target = $region36
      $region35: #{tpu_custom_call.1} parent=5 // pred_region
        %s203 = ssub.s32 %s13, 2
        // Predicated region
        $region37: #{tpu_custom_call.1} parent=35 // pred_check
          %p204 = pneg %p84
        $region38: #{tpu_custom_call.1} parent=35 // pred_check_branch
          %206 = sbr.rel (%p204) target = $region40
        $region39: #{tpu_custom_call.1} parent=35 // pred_region
          %s207 = sand.u32 %s69, 1
          %s208 = scalar_lea.sflag [#allocation5], %s207
          %s209 = sand.u32 %s69, 1
          %s210 = smul.addr %s209, 16
          %s211 = scalar_lea.vmem [#allocation6], %s210
          %212 = dma.done %s208, 256
        $region40: #{tpu_custom_call.1} parent=35 // pred_fallthru
          _
      $region36: #{tpu_custom_call.1} parent=5 // pred_fallthru
        _
    $region6: #{tpu_custom_call.1} parent=1 // loop_footer
      %s17 = sadd.s32 1, %s13
    $region7: #{tpu_custom_call.1} parent=1 // loop_footer_branch
      %12 = sbr.rel target = $region3
    $region8: #{tpu_custom_call.1} parent=1 // loop_exit
      _
    %213 = vsyncpa [#allocation4], 1
    %s214 = scalar_lea.sflag [#allocation4], 1
    %215 = vsyncpa %s214, 1
    %216 = vsyncpa [#allocation5], 1
    %s217 = scalar_lea.sflag [#allocation5], 1
    %218 = vsyncpa %s217, 1

</llo_original>
